<compile_context>
chip_gen: v6e
topology: v6e:2x2x1
jax: 0.10.0
libtpu: 0.0.40
codegen_flags: <defaults>
</compile_context>

<pallas_src>
import functools

import jax
import jax.numpy as jnp
from jax import lax
from jax.experimental import pallas as pl
from jax.experimental.pallas import tpu as pltpu

_LANES = 128                              # lane width of every block / plane
_TARGET_BLOCK_BYTES = 4 * 1024 * 1024     # per-input per-buffer block target


def _cdiv(a, b):
    return -(-a // b)


def _round_up(x, m):
    return _cdiv(x, m) * m


def _stats_kernel(pred_ref, true_ref, out_ref, *, delta, n_rows, tile_rows,
                  total_tiles, steps_per_core, ragged, has_dummy):
    """Accumulates six sufficient statistics for one (core, tile) grid step.

    out_ref block: (1, 6, 8, LANES) f32, resident across the inner grid axis.
      plane 0: sum(p)    1: sum(t)    2: sum(p*p)
      plane 3: sum(t*t)  4: sum(p*t)  5: sum(huber(p, t))
    """
    core = pl.program_id(0)
    step = pl.program_id(1)

    @pl.when(step == 0)
    def _init():
        out_ref[...] = jnp.zeros_like(out_ref)

    lanes = pred_ref.shape[-1]
    n_groups = tile_rows // 8
    tile_idx = core * steps_per_core + step          # global row-tile index
    half_delta_sq = 0.5 * delta * delta

    def _accumulate_tile():
        if ragged:
            # Row predicate for the (possibly OOB) trailing rows of the last
            # tile: Pallas edge blocks past the array end contain garbage.
            iota_rows = lax.broadcasted_iota(jnp.int32, (8, lanes), 0)
            row_base = tile_idx * tile_rows

        def group(g, carry):
            s_p, s_t, s_pp, s_tt, s_pt, s_h = carry
            r0 = pl.multiple_of(g * 8, 8)
            p = pred_ref[pl.ds(r0, 8), :].astype(jnp.float32)
            t = true_ref[pl.ds(r0, 8), :].astype(jnp.float32)
            if ragged:
                valid = (iota_rows + (row_base + g * 8)) < n_rows
                p = jnp.where(valid, p, 0.0)
                t = jnp.where(valid, t, 0.0)
            d = p - t
            ad = jnp.abs(d)
            quad = 0.5 * (d * d)
            if delta == 1.0:                          # saves one vmul/elem
                lin = ad - half_delta_sq
            else:
                lin = delta * ad - half_delta_sq
            hub = jnp.where(ad <= delta, quad, lin)
            return (s_p + p, s_t + t, s_pp + p * p, s_tt + t * t,
                    s_pt + p * t, s_h + hub)

        zero = jnp.zeros((8, lanes), jnp.float32)
        sums = lax.fori_loop(0, n_groups, group, (zero,) * 6,
                             unroll=min(8, n_groups))
        for k in range(6):
            out_ref[0, k] += sums[k]

    if has_dummy:
        # Trailing grid steps on the last core may not map to a real tile.
        pl.when(tile_idx < total_tiles)(_accumulate_tile)
    else:
        _accumulate_tile()


def _corr_huber_sums(y_pred, y_true, delta=1.0, tile_rows=None):
    """Streams both tensors once; returns the 6 global sums and true n."""
    p = jnp.ravel(y_pred)
    t = jnp.ravel(y_true)
    n = int(p.shape[0])

    # Reshape to (-1, 128): free for contiguous arrays.  Only when n is not a
    # multiple of 128 do we append <=127 zeros (exact: they add 0 everywhere).
    rem = n % _LANES
    if rem:
        pad = _LANES - rem
        p = jnp.pad(p, (0, pad))
        t = jnp.pad(t, (0, pad))
    rows = p.shape[0] // _LANES
    p2 = p.reshape(rows, _LANES)
    t2 = t.reshape(rows, _LANES)

    it_p, it_t = p.dtype.itemsize, t.dtype.itemsize
    sub = max(8, 32 // min(it_p, it_t))               # 8 f32, 16 bf16, 32 i8
    if tile_rows is None:
        tile_rows = _TARGET_BLOCK_BYTES // (_LANES * max(it_p, it_t))
    tile_rows = max(sub, min(_round_up(tile_rows, sub), _round_up(rows, sub)))

    total_tiles = _cdiv(rows, tile_rows)
    ragged = (rows % tile_rows) != 0

    # Leading "parallel" axis: split tiles across the 2 TensorCores on v7x;
    # on 1-TC chips it simply iterates sequentially.
    num_cores = 2 if total_tiles >= 2 else 1
    steps_per_core = _cdiv(total_tiles, num_cores)
    has_dummy = num_cores * steps_per_core != total_tiles

    if has_dummy:
        def in_map(c, i):
            return (jnp.minimum(c * steps_per_core + i, total_tiles - 1), 0)
    else:
        def in_map(c, i):
            return (c * steps_per_core + i, 0)

    kernel = functools.partial(
        _stats_kernel, delta=float(delta), n_rows=rows, tile_rows=tile_rows,
        total_tiles=total_tiles, steps_per_core=steps_per_core,
        ragged=ragged, has_dummy=has_dummy)

    raw = pl.pallas_call(
        kernel,
        out_shape=jax.ShapeDtypeStruct((num_cores, 6, 8, _LANES), jnp.float32),
        grid_spec=pltpu.PrefetchScalarGridSpec(
            num_scalar_prefetch=0,
            grid=(num_cores, steps_per_core),
            in_specs=[
                pl.BlockSpec((tile_rows, _LANES), in_map),
                pl.BlockSpec((tile_rows, _LANES), in_map),
            ],
            out_specs=pl.BlockSpec((1, 6, 8, _LANES), lambda c, i: (c, 0, 0, 0)),
        ),
        compiler_params=pltpu.CompilerParams(
            dimension_semantics=("parallel", "arbitrary"),
            vmem_limit_bytes=32 * 1024 * 1024,
        ),
    )(p2, t2)

    # Per-core partial sums -> global sums (tiny wrapper-side reduction).
    return jnp.sum(raw, axis=(0, 2, 3)), n


def _corr_huber_stats(y_pred, y_true, delta=1.0, eps=1e-8, tile_rows=None):
    """Returns a length-2 f32 array: (huber_mean, corr_loss)."""
    sums, n = _corr_huber_sums(y_pred, y_true, delta=delta, tile_rows=tile_rows)
    nf = jnp.float32(n)
    sum_p, sum_t, sum_pp, sum_tt, sum_pt, sum_h = (sums[i] for i in range(6))
    mean_p = sum_p / nf
    mean_t = sum_t / nf
    cov = sum_pt - nf * mean_p * mean_t
    var_p = jnp.maximum(sum_pp - nf * mean_p * mean_p, 0.0)
    var_t = jnp.maximum(sum_tt - nf * mean_t * mean_t, 0.0)
    corr = cov / (jnp.sqrt(var_p) * jnp.sqrt(var_t) + eps)
    huber = sum_h / nf
    return jnp.stack([huber, 1.0 - corr])


class AdaptiveCorrelationLoss:
    """JAX/Pallas port of the PyTorch AdaptiveCorrelationLoss module."""

    def __init__(self, delta=1.0, init_alpha=0.5, adaptation_rate=0.01):
        self.delta = delta
        self.alpha = init_alpha
        self.adaptation_rate = adaptation_rate
        self.prev_corr = 0.0
        self.steps = 0

    def __call__(self, y_pred, y_true):
        stats = _corr_huber_stats(y_pred, y_true, delta=self.delta, eps=1e-8)
        huber, corr_loss = stats[0], stats[1]
        # Stateful adaptation (mirrors the .item()-based Python logic).
        current_corr = 1.0 - float(corr_loss)
        if self.steps > 0:
            corr_change = current_corr - self.prev_corr
            if corr_change > 0:
                self.alpha = max(0.1, self.alpha - self.adaptation_rate)
            else:
                self.alpha = min(0.9, self.alpha + self.adaptation_rate)
        self.prev_corr = current_corr
        self.steps += 1
        return self.alpha * huber + (1.0 - self.alpha) * corr_loss


# ----------------------------- pure-JAX reference -----------------------------
def _reference_stats(y_pred, y_true, delta=1.0, eps=1e-8):
    p = jnp.ravel(y_pred).astype(jnp.float32)
    t = jnp.ravel(y_true).astype(jnp.float32)
    diff = p - t
    absd = jnp.abs(diff)
    huber = jnp.mean(
        jnp.where(absd <= delta, 0.5 * diff * diff, delta * (absd - 0.5 * delta))
    )
    vx = p - jnp.mean(p)
    vy = t - jnp.mean(t)
    corr = jnp.sum(vx * vy) / (
        jnp.sqrt(jnp.sum(vx * vx)) * jnp.sqrt(jnp.sum(vy * vy)) + eps
    )
    return huber, 1.0 - corr


def _reference_loss(y_pred, y_true, alpha, delta=1.0, eps=1e-8):
    huber, corr_loss = _reference_stats(y_pred, y_true, delta=delta, eps=eps)
    return alpha * huber + (1.0 - alpha) * corr_loss


if __name__ == "__main__":
    key = jax.random.PRNGKey(0)
    k1, k2, k3, k4, k5, k6 = jax.random.split(key, 6)

    # 1) NCHW-like inputs: batch=2, channels=4, spatial=16x16 -> 2048 elements.
    y_pred = jax.random.normal(k1, (2, 4, 16, 16), dtype=jnp.float32)
    y_true = y_pred + 0.1 * jax.random.normal(k2, (2, 4, 16, 16), dtype=jnp.float32)

    loss_mod = AdaptiveCorrelationLoss(delta=1.0, init_alpha=0.5, adaptation_rate=0.01)
    loss0 = jax.block_until_ready(loss_mod(y_pred, y_true))
    ref0 = _reference_loss(y_pred, y_true, alpha=0.5)
    assert jnp.allclose(loss0, ref0, rtol=5e-4, atol=1e-5), (loss0, ref0)

    # Second step exercises the adaptive-alpha branch.
    loss1 = jax.block_until_ready(loss_mod(y_pred, y_true))

    # 2) bf16, ragged size: 8640 elems -> 64-elem sub-row pad + masked tail rows.
    yp_b = jax.random.normal(k3, (3, 5, 24, 24), dtype=jnp.bfloat16)
    yt_b = (yp_b.astype(jnp.float32)
            + 0.2 * jax.random.normal(k4, (3, 5, 24, 24))).astype(jnp.bfloat16)
    got_b = jax.block_until_ready(_corr_huber_stats(yp_b, yt_b))
    ref_hb, ref_cb = _reference_stats(yp_b, yt_b)
    assert jnp.allclose(got_b[0], ref_hb, rtol=5e-4, atol=1e-5), (got_b[0], ref_hb)
    assert jnp.allclose(got_b[1], ref_cb, rtol=5e-4, atol=1e-5), (got_b[1], ref_cb)

    # 3) Multi-tile / 2-core / dummy-step / ragged-tile path (tile_rows override):
    #    136 rows of 128 -> 3 tiles of 64 rows over a 2-wide "parallel" axis.
    yp_m = jax.random.normal(k5, (17, 1024), dtype=jnp.float32) * 2.0 + 0.5
    yt_m = 0.7 * yp_m + 0.3 * jax.random.normal(k6, (17, 1024), dtype=jnp.float32)
    got_m = jax.block_until_ready(_corr_huber_stats(yp_m, yt_m, tile_rows=64))
    ref_hm, ref_cm = _reference_stats(yp_m, yt_m)
    assert jnp.allclose(got_m[0], ref_hm, rtol=5e-4, atol=1e-5), (got_m[0], ref_hm)
    assert jnp.allclose(got_m[1], ref_cm, rtol=5e-4, atol=1e-5), (got_m[1], ref_cm)

    print("KERNEL_OK")
</pallas_src>

<mosaic_0001>
module attributes {stable_mosaic.version = 11 : i64} {
  func.func @_stats_kernel(%arg0: i32, %arg1: i32, %arg2: memref<16x128xf32, #tpu.memory_space<vmem>>, %arg3: memref<16x128xf32, #tpu.memory_space<vmem>>, %arg4: memref<1x6x8x128xf32, #tpu.memory_space<vmem>>) attributes {dimension_semantics = [#tpu.dimension_semantics<parallel>, #tpu.dimension_semantics<arbitrary>], iteration_bounds = array<i64: 1, 1>, scalar_prefetch = 0 : i64, scratch_operands = 0 : i64, tpu.core_type = #tpu.core_type<tc>, window_params = [{transform_indices = @transform_0, window_bounds = array<i64: 16, 128>}, {transform_indices = @transform_1, window_bounds = array<i64: 16, 128>}, {transform_indices = @transform_2, window_bounds = array<i64: 1, 6, 8, 128>}]} {
    %c0_i32 = arith.constant 0 : i32
    %0 = arith.cmpi eq, %arg1, %c0_i32 : i32
    %1 = arith.extui %0 : i1 to i32
    %c0_i32_0 = arith.constant 0 : i32
    %2 = arith.cmpi ne, %1, %c0_i32_0 : i32
    scf.if %2 {
      %cst_55 = arith.constant 0.000000e+00 : f32
      %90 = vector.broadcast %cst_55 : f32 to vector<1x6x8x128xf32>
      %c0_56 = arith.constant 0 : index
      %c0_57 = arith.constant 0 : index
      %c0_58 = arith.constant 0 : index
      %c0_59 = arith.constant 0 : index
      %91 = vector.load %arg4[%c0_56, %c0_57, %c0_58, %c0_59] : memref<1x6x8x128xf32, #tpu.memory_space<vmem>>, vector<1x6x8x128xf32>
      tpu.vector_store %arg4[%c0_56, %c0_57, %c0_58, %c0_59], %90 {strides = array<i32>} : memref<1x6x8x128xf32, #tpu.memory_space<vmem>>, vector<1x6x8x128xf32>,
    } else {
    }
    %cst = arith.constant 0.000000e+00 : f32
    %3 = vector.broadcast %cst : f32 to vector<8x128xf32>
    %c0_i32_1 = arith.constant 0 : i32
    %c8_i32 = arith.constant 8 : i32
    %4 = arith.muli %c0_i32_1, %c8_i32 : i32
    %5 = tpu.assume_multiple %4, 8 : i32
    %6 = arith.index_cast %5 : i32 to index
    %c0 = arith.constant 0 : index
    %7 = vector.load %arg2[%6, %c0] : memref<16x128xf32, #tpu.memory_space<vmem>>, vector<8x128xf32>
    %8 = arith.index_cast %5 : i32 to index
    %c0_2 = arith.constant 0 : index
    %9 = vector.load %arg3[%8, %c0_2] : memref<16x128xf32, #tpu.memory_space<vmem>>, vector<8x128xf32>
    %10 = arith.subf %7, %9 : vector<8x128xf32>
    %11 = math.absf %10 : vector<8x128xf32>
    %12 = arith.mulf %10, %10 : vector<8x128xf32>
    %cst_3 = arith.constant 5.000000e-01 : f32
    %13 = vector.broadcast %cst_3 : f32 to vector<8x128xf32>
    %14 = arith.mulf %13, %12 : vector<8x128xf32>
    %cst_4 = arith.constant 5.000000e-01 : f32
    %15 = vector.broadcast %cst_4 : f32 to vector<8x128xf32>
    %16 = arith.subf %11, %15 : vector<8x128xf32>
    %cst_5 = arith.constant 1.000000e+00 : f32
    %17 = vector.broadcast %cst_5 : f32 to vector<8x128xf32>
    %18 = arith.cmpf ole, %11, %17 : vector<8x128xf32>
    %19 = arith.select %18, %14, %16 : vector<8x128xi1>, vector<8x128xf32>
    %20 = arith.addf %3, %7 : vector<8x128xf32>
    %21 = arith.addf %3, %9 : vector<8x128xf32>
    %22 = arith.mulf %7, %7 : vector<8x128xf32>
    %23 = arith.addf %3, %22 : vector<8x128xf32>
    %24 = arith.mulf %9, %9 : vector<8x128xf32>
    %25 = arith.addf %3, %24 : vector<8x128xf32>
    %26 = arith.mulf %7, %9 : vector<8x128xf32>
    %27 = arith.addf %3, %26 : vector<8x128xf32>
    %28 = arith.addf %3, %19 : vector<8x128xf32>
    %c1_i32 = arith.constant 1 : i32
    %c8_i32_6 = arith.constant 8 : i32
    %29 = arith.muli %c1_i32, %c8_i32_6 : i32
    %30 = tpu.assume_multiple %29, 8 : i32
    %31 = arith.index_cast %30 : i32 to index
    %c0_7 = arith.constant 0 : index
    %32 = vector.load %arg2[%31, %c0_7] : memref<16x128xf32, #tpu.memory_space<vmem>>, vector<8x128xf32>
    %33 = arith.index_cast %30 : i32 to index
    %c0_8 = arith.constant 0 : index
    %34 = vector.load %arg3[%33, %c0_8] : memref<16x128xf32, #tpu.memory_space<vmem>>, vector<8x128xf32>
    %35 = arith.subf %32, %34 : vector<8x128xf32>
    %36 = math.absf %35 : vector<8x128xf32>
    %37 = arith.mulf %35, %35 : vector<8x128xf32>
    %cst_9 = arith.constant 5.000000e-01 : f32
    %38 = vector.broadcast %cst_9 : f32 to vector<8x128xf32>
    %39 = arith.mulf %38, %37 : vector<8x128xf32>
    %cst_10 = arith.constant 5.000000e-01 : f32
    %40 = vector.broadcast %cst_10 : f32 to vector<8x128xf32>
    %41 = arith.subf %36, %40 : vector<8x128xf32>
    %cst_11 = arith.constant 1.000000e+00 : f32
    %42 = vector.broadcast %cst_11 : f32 to vector<8x128xf32>
    %43 = arith.cmpf ole, %36, %42 : vector<8x128xf32>
    %44 = arith.select %43, %39, %41 : vector<8x128xi1>, vector<8x128xf32>
    %45 = arith.addf %20, %32 : vector<8x128xf32>
    %46 = arith.addf %21, %34 : vector<8x128xf32>
    %47 = arith.mulf %32, %32 : vector<8x128xf32>
    %48 = arith.addf %23, %47 : vector<8x128xf32>
    %49 = arith.mulf %34, %34 : vector<8x128xf32>
    %50 = arith.addf %25, %49 : vector<8x128xf32>
    %51 = arith.mulf %32, %34 : vector<8x128xf32>
    %52 = arith.addf %27, %51 : vector<8x128xf32>
    %53 = arith.addf %28, %44 : vector<8x128xf32>
    %c2_i32 = arith.constant 2 : i32
    %c0_12 = arith.constant 0 : index
    %c0_13 = arith.constant 0 : index
    %c0_14 = arith.constant 0 : index
    %c0_15 = arith.constant 0 : index
    %54 = vector.load %arg4[%c0_12, %c0_13, %c0_14, %c0_15] : memref<1x6x8x128xf32, #tpu.memory_space<vmem>>, vector<1x1x8x128xf32>
    %55 = vector.shape_cast %54 : vector<1x1x8x128xf32> to vector<8x128xf32>
    %56 = arith.addf %55, %45 : vector<8x128xf32>
    %c0_16 = arith.constant 0 : index
    %c0_17 = arith.constant 0 : index
    %c0_18 = arith.constant 0 : index
    %c0_19 = arith.constant 0 : index
    %57 = vector.load %arg4[%c0_16, %c0_17, %c0_18, %c0_19] : memref<1x6x8x128xf32, #tpu.memory_space<vmem>>, vector<1x1x8x128xf32>
    %58 = vector.shape_cast %57 : vector<1x1x8x128xf32> to vector<8x128xf32>
    %59 = vector.shape_cast %56 : vector<8x128xf32> to vector<1x1x8x128xf32>
    tpu.vector_store %arg4[%c0_16, %c0_17, %c0_18, %c0_19], %59 {strides = array<i32>} : memref<1x6x8x128xf32, #tpu.memory_space<vmem>>, vector<1x1x8x128xf32>,
    %c0_20 = arith.constant 0 : index
    %c1 = arith.constant 1 : index
    %c0_21 = arith.constant 0 : index
    %c0_22 = arith.constant 0 : index
    %60 = vector.load %arg4[%c0_20, %c1, %c0_21, %c0_22] : memref<1x6x8x128xf32, #tpu.memory_space<vmem>>, vector<1x1x8x128xf32>
    %61 = vector.shape_cast %60 : vector<1x1x8x128xf32> to vector<8x128xf32>
    %62 = arith.addf %61, %46 : vector<8x128xf32>
    %c0_23 = arith.constant 0 : index
    %c1_24 = arith.constant 1 : index
    %c0_25 = arith.constant 0 : index
    %c0_26 = arith.constant 0 : index
    %63 = vector.load %arg4[%c0_23, %c1_24, %c0_25, %c0_26] : memref<1x6x8x128xf32, #tpu.memory_space<vmem>>, vector<1x1x8x128xf32>
    %64 = vector.shape_cast %63 : vector<1x1x8x128xf32> to vector<8x128xf32>
    %65 = vector.shape_cast %62 : vector<8x128xf32> to vector<1x1x8x128xf32>
    tpu.vector_store %arg4[%c0_23, %c1_24, %c0_25, %c0_26], %65 {strides = array<i32>} : memref<1x6x8x128xf32, #tpu.memory_space<vmem>>, vector<1x1x8x128xf32>,
    %c0_27 = arith.constant 0 : index
    %c2 = arith.constant 2 : index
    %c0_28 = arith.constant 0 : index
    %c0_29 = arith.constant 0 : index
    %66 = vector.load %arg4[%c0_27, %c2, %c0_28, %c0_29] : memref<1x6x8x128xf32, #tpu.memory_space<vmem>>, vector<1x1x8x128xf32>
    %67 = vector.shape_cast %66 : vector<1x1x8x128xf32> to vector<8x128xf32>
    %68 = arith.addf %67, %48 : vector<8x128xf32>
    %c0_30 = arith.constant 0 : index
    %c2_31 = arith.constant 2 : index
    %c0_32 = arith.constant 0 : index
    %c0_33 = arith.constant 0 : index
    %69 = vector.load %arg4[%c0_30, %c2_31, %c0_32, %c0_33] : memref<1x6x8x128xf32, #tpu.memory_space<vmem>>, vector<1x1x8x128xf32>
    %70 = vector.shape_cast %69 : vector<1x1x8x128xf32> to vector<8x128xf32>
    %71 = vector.shape_cast %68 : vector<8x128xf32> to vector<1x1x8x128xf32>
    tpu.vector_store %arg4[%c0_30, %c2_31, %c0_32, %c0_33], %71 {strides = array<i32>} : memref<1x6x8x128xf32, #tpu.memory_space<vmem>>, vector<1x1x8x128xf32>,
    %c0_34 = arith.constant 0 : index
    %c3 = arith.constant 3 : index
    %c0_35 = arith.constant 0 : index
    %c0_36 = arith.constant 0 : index
    %72 = vector.load %arg4[%c0_34, %c3, %c0_35, %c0_36] : memref<1x6x8x128xf32, #tpu.memory_space<vmem>>, vector<1x1x8x128xf32>
    %73 = vector.shape_cast %72 : vector<1x1x8x128xf32> to vector<8x128xf32>
    %74 = arith.addf %73, %50 : vector<8x128xf32>
    %c0_37 = arith.constant 0 : index
    %c3_38 = arith.constant 3 : index
    %c0_39 = arith.constant 0 : index
    %c0_40 = arith.constant 0 : index
    %75 = vector.load %arg4[%c0_37, %c3_38, %c0_39, %c0_40] : memref<1x6x8x128xf32, #tpu.memory_space<vmem>>, vector<1x1x8x128xf32>
    %76 = vector.shape_cast %75 : vector<1x1x8x128xf32> to vector<8x128xf32>
    %77 = vector.shape_cast %74 : vector<8x128xf32> to vector<1x1x8x128xf32>
    tpu.vector_store %arg4[%c0_37, %c3_38, %c0_39, %c0_40], %77 {strides = array<i32>} : memref<1x6x8x128xf32, #tpu.memory_space<vmem>>, vector<1x1x8x128xf32>,
    %c0_41 = arith.constant 0 : index
    %c4 = arith.constant 4 : index
    %c0_42 = arith.constant 0 : index
    %c0_43 = arith.constant 0 : index
    %78 = vector.load %arg4[%c0_41, %c4, %c0_42, %c0_43] : memref<1x6x8x128xf32, #tpu.memory_space<vmem>>, vector<1x1x8x128xf32>
    %79 = vector.shape_cast %78 : vector<1x1x8x128xf32> to vector<8x128xf32>
    %80 = arith.addf %79, %52 : vector<8x128xf32>
    %c0_44 = arith.constant 0 : index
    %c4_45 = arith.constant 4 : index
    %c0_46 = arith.constant 0 : index
    %c0_47 = arith.constant 0 : index
    %81 = vector.load %arg4[%c0_44, %c4_45, %c0_46, %c0_47] : memref<1x6x8x128xf32, #tpu.memory_space<vmem>>, vector<1x1x8x128xf32>
    %82 = vector.shape_cast %81 : vector<1x1x8x128xf32> to vector<8x128xf32>
    %83 = vector.shape_cast %80 : vector<8x128xf32> to vector<1x1x8x128xf32>
    tpu.vector_store %arg4[%c0_44, %c4_45, %c0_46, %c0_47], %83 {strides = array<i32>} : memref<1x6x8x128xf32, #tpu.memory_space<vmem>>, vector<1x1x8x128xf32>,
    %c0_48 = arith.constant 0 : index
    %c5 = arith.constant 5 : index
    %c0_49 = arith.constant 0 : index
    %c0_50 = arith.constant 0 : index
    %84 = vector.load %arg4[%c0_48, %c5, %c0_49, %c0_50] : memref<1x6x8x128xf32, #tpu.memory_space<vmem>>, vector<1x1x8x128xf32>
    %85 = vector.shape_cast %84 : vector<1x1x8x128xf32> to vector<8x128xf32>
    %86 = arith.addf %85, %53 : vector<8x128xf32>
    %c0_51 = arith.constant 0 : index
    %c5_52 = arith.constant 5 : index
    %c0_53 = arith.constant 0 : index
    %c0_54 = arith.constant 0 : index
    %87 = vector.load %arg4[%c0_51, %c5_52, %c0_53, %c0_54] : memref<1x6x8x128xf32, #tpu.memory_space<vmem>>, vector<1x1x8x128xf32>
    %88 = vector.shape_cast %87 : vector<1x1x8x128xf32> to vector<8x128xf32>
    %89 = vector.shape_cast %86 : vector<8x128xf32> to vector<1x1x8x128xf32>
    tpu.vector_store %arg4[%c0_51, %c5_52, %c0_53, %c0_54], %89 {strides = array<i32>} : memref<1x6x8x128xf32, #tpu.memory_space<vmem>>, vector<1x1x8x128xf32>,
    return
  }
  func.func @transform_0(%arg0: i32, %arg1: i32) -> (i32, i32) {
    %c1_i32 = arith.constant 1 : i32
    %0 = arith.muli %arg0, %c1_i32 : i32
    %1 = arith.addi %0, %arg1 : i32
    %c0_i32 = arith.constant 0 : i32
    %c0_i32_0 = arith.constant 0 : i32
    return %1, %c0_i32 : i32, i32
  }
  func.func @transform_1(%arg0: i32, %arg1: i32) -> (i32, i32) {
    %c1_i32 = arith.constant 1 : i32
    %0 = arith.muli %arg0, %c1_i32 : i32
    %1 = arith.addi %0, %arg1 : i32
    %c0_i32 = arith.constant 0 : i32
    %c0_i32_0 = arith.constant 0 : i32
    return %1, %c0_i32 : i32, i32
  }
  func.func @transform_2(%arg0: i32, %arg1: i32) -> (i32, i32, i32, i32) {
    %c0_i32 = arith.constant 0 : i32
    %c0_i32_0 = arith.constant 0 : i32
    %c0_i32_1 = arith.constant 0 : i32
    %c0_i32_2 = arith.constant 0 : i32
    return %arg0, %c0_i32, %c0_i32_0, %c0_i32_1 : i32, i32, i32, i32
  }
}

</mosaic_0001>

<llo_original>
// kernel: tpu_custom_call.1
$region0: #{tpu_custom_call.1}
  #allocation0 [shape = 'u32[]', space=smem, size = 0x4, offset = 0x4, fixed_abs, tag = 'smem constant byte address 0x4 - core index']
  #allocation1 [shape = 'u32[144,128]{1,0:T(1,128)}', space=vmem, size = 0x12000, scoped, tag = 'internal scratch']
  %s0 = inlined_call_operand.hbm [shape: f32[16,128], index: 0, kind: input, shape index: {}]
  %s1 = inlined_call_operand.hbm [shape: f32[16,128], index: 1, kind: input, shape index: {}]
  %s2 = inlined_call_operand.hbm [shape: f32[1,6,8,128], index: 2, kind: output, shape index: {}]
  %s3 = sld [smem:[#allocation0]]
  $region30: #{tpu_custom_call.1} parent=0
    _
  %s5 = ssub.s32 1, %s3
  %s6 = scalar_select 0, %s5, %s3
  $region1: #{tpu_custom_call.1} parent=0
    #allocation2 [shape = 'u8[8192]{0}', space=vmem, size = 0x2000, scoped, tag = 'input window, operand 0, single buffered']
    #allocation3 [shape = 's32[1]{0}', space=sflag, size = 0x4, scoped, tag = 'scoped memory for tpu_custom_call.1']
    #allocation4 [shape = 's32[1]{0}', space=sflag, size = 0x4, scoped, tag = 'scoped memory for tpu_custom_call.1']
    #allocation5 [shape = 'u8[8192]{0}', space=vmem, size = 0x2000, scoped, tag = 'input window, operand 1, single buffered']
    #allocation6 [shape = 's32[1]{0}', space=sflag, size = 0x4, scoped, tag = 'scoped memory for tpu_custom_call.1']
    #allocation7 [shape = 'u8[24576]{0}', space=vmem, size = 0x6000, scoped, tag = 'output window, operand 0, single buffered']
    %7 = vsyncpa [#allocation3], 0
    %8 = vsyncpa [#allocation6], 0
    %9 = vsyncpa [#allocation4], 0
    // Predicated region
    $region2: #{tpu_custom_call.1} parent=1 // pred_check
      _
    $region3: #{tpu_custom_call.1} parent=1 // pred_check_branch
      %11 = sbr.rel (0) target = $region5
    $region4: #{tpu_custom_call.1} parent=1 // pred_region
      %s12 = sadd.s32 0, 0
      %s13 = smul.u32 2, %s12
      %s15 = ssub.s32 256, 256
      %16 = vsyncadd [#allocation3], %s15
      %s17 = smul.addr %s13, 128
      %s18 = scalar_lea.hbm %s0, %s17
      %s19 = sshll.u32 [#allocation2], 4
      %s20 = int_to_ptr.vmem [resolvable:$true] %s19
      %25 = dma.hbm_to_vmem [thread:$0]  %s18, 256, %s20, [#allocation3], 128, 128, 8
    $region5: #{tpu_custom_call.1} parent=1 // pred_fallthru
      _
    // Predicated region
    $region6: #{tpu_custom_call.1} parent=1 // pred_check
      _
    $region7: #{tpu_custom_call.1} parent=1 // pred_check_branch
      %27 = sbr.rel (0) target = $region9
    $region8: #{tpu_custom_call.1} parent=1 // pred_region
      %s28 = sadd.s32 0, 0
      %s29 = smul.u32 2, %s28
      %s31 = ssub.s32 256, 256
      %32 = vsyncadd [#allocation6], %s31
      %s33 = smul.addr %s29, 128
      %s34 = scalar_lea.hbm %s1, %s33
      %s35 = sshll.u32 [#allocation5], 4
      %s36 = int_to_ptr.vmem [resolvable:$true] %s35
      %41 = dma.hbm_to_vmem [thread:$0]  %s34, 256, %s36, [#allocation6], 128, 128, 8
    $region9: #{tpu_custom_call.1} parent=1 // pred_fallthru
      _
    // Predicated region
    $region10: #{tpu_custom_call.1} parent=1 // pred_check
      _
    $region11: #{tpu_custom_call.1} parent=1 // pred_check_branch
      %43 = sbr.rel (0) target = $region13
    $region12: #{tpu_custom_call.1} parent=1 // pred_region
      %44 = dma.done [#allocation3], 256
    $region13: #{tpu_custom_call.1} parent=1 // pred_fallthru
      _
    // Predicated region
    $region14: #{tpu_custom_call.1} parent=1 // pred_check
      _
    $region15: #{tpu_custom_call.1} parent=1 // pred_check_branch
      %46 = sbr.rel (0) target = $region17
    $region16: #{tpu_custom_call.1} parent=1 // pred_region
      %47 = dma.done [#allocation6], 256
    $region17: #{tpu_custom_call.1} parent=1 // pred_fallthru
      _
    %s48 = sadd.s32 0, 0
    %s49 = smul.u32 2, %s48
    %s50 = sadd.s32 0, 0
    %s51 = smul.u32 2, %s50
    %p52 = scmp.eq.s32.totalorder 0, 0
    // Predicated region
    $region18: #{tpu_custom_call.1} parent=1 // pred_check
      %p53 = pneg %p52
    $region19: #{tpu_custom_call.1} parent=1 // pred_check_branch
      %55 = sbr.rel (%p53) target = $region21
    $region20: #{tpu_custom_call.1} parent=1 // pred_region
      %56 = vst [vmem:[#allocation7] sm:$0xff] 0.0
      %57 = vst [vmem:[#allocation7 + $0x8] sm:$0xff] 0.0
      %58 = vst [vmem:[#allocation7 + $0x10] sm:$0xff] 0.0
      %59 = vst [vmem:[#allocation7 + $0x18] sm:$0xff] 0.0
      %60 = vst [vmem:[#allocation7 + $0x20] sm:$0xff] 0.0
      %61 = vst [vmem:[#allocation7 + $0x28] sm:$0xff] 0.0
    $region21: #{tpu_custom_call.1} parent=1 // pred_fallthru
      _
    %v62 = vld [vmem:[#allocation2] sm:$0xff]
    %v63 = vld [vmem:[#allocation5] sm:$0xff]
    %v64 = vsub.f32 %v62, %v63
    %v65 = vand.u32 2147483647, %v64
    %v66 = vmul.f32 %v64, %v64
    %v67 = vmul.f32 %v66, 0.5
    %v68 = vsub.f32 %v65, 0.5
    %vm69 = vcmp.le.f32.partialorder %v65, 1.0
    %v70 = vsel %vm69, %v67, %v68
    %v71 = vadd.f32 %v62, 0.0
    %v72 = vadd.f32 %v63, 0.0
    %v73 = vmul.f32 %v62, %v62
    %v74 = vadd.f32 %v73, 0.0
    %v75 = vmul.f32 %v63, %v63
    %v76 = vadd.f32 %v75, 0.0
    %v77 = vmul.f32 %v62, %v63
    %v78 = vadd.f32 %v77, 0.0
    %v79 = vadd.f32 %v70, 0.0
    %s80 = scalar_lea.vmem [#allocation2], 8
    %v81 = vld [vmem:[%s80] sm:$0xff]
    %s82 = scalar_lea.vmem [#allocation5], 8
    %v83 = vld [vmem:[%s82] sm:$0xff]
    %v84 = vsub.f32 %v81, %v83
    %v85 = vand.u32 2147483647, %v84
    %v86 = vmul.f32 %v84, %v84
    %v87 = vmul.f32 %v86, 0.5
    %v88 = vsub.f32 %v85, 0.5
    %vm89 = vcmp.le.f32.partialorder %v85, 1.0
    %v90 = vsel %vm89, %v87, %v88
    %v91 = vadd.f32 %v71, %v81
    %v92 = vadd.f32 %v72, %v83
    %v93 = vmul.f32 %v81, %v81
    %v94 = vadd.f32 %v74, %v93
    %v95 = vmul.f32 %v83, %v83
    %v96 = vadd.f32 %v76, %v95
    %v97 = vmul.f32 %v81, %v83
    %v98 = vadd.f32 %v78, %v97
    %v99 = vadd.f32 %v79, %v90
    %v100 = vld [vmem:[#allocation7] sm:$0xff]
    %v101 = vadd.f32 %v100, %v91
    %102 = vst [vmem:[#allocation7] sm:$0xff] %v101
    %s103 = scalar_lea.vmem [#allocation7], 8
    %v104 = vld [vmem:[%s103] sm:$0xff]
    %v105 = vadd.f32 %v104, %v92
    %106 = vst [vmem:[%s103] sm:$0xff] %v105
    %s107 = scalar_lea.vmem [#allocation7], 16
    %v108 = vld [vmem:[%s107] sm:$0xff]
    %v109 = vadd.f32 %v108, %v94
    %110 = vst [vmem:[%s107] sm:$0xff] %v109
    %s111 = scalar_lea.vmem [#allocation7], 24
    %v112 = vld [vmem:[%s111] sm:$0xff]
    %v113 = vadd.f32 %v112, %v96
    %114 = vst [vmem:[%s111] sm:$0xff] %v113
    %s115 = scalar_lea.vmem [#allocation7], 32
    %v116 = vld [vmem:[%s115] sm:$0xff]
    %v117 = vadd.f32 %v116, %v98
    %118 = vst [vmem:[%s115] sm:$0xff] %v117
    %s119 = scalar_lea.vmem [#allocation7], 40
    %v120 = vld [vmem:[%s119] sm:$0xff]
    %v121 = vadd.f32 %v120, %v99
    %122 = vst [vmem:[%s119] sm:$0xff] %v121
    // Predicated region
    $region22: #{tpu_custom_call.1} parent=1 // pred_check
      _
    $region23: #{tpu_custom_call.1} parent=1 // pred_check_branch
      %124 = sbr.rel (0) target = $region25
    $region24: #{tpu_custom_call.1} parent=1 // pred_region
      %s126 = ssub.s32 768, 768
      %127 = vsyncadd [#allocation4], %s126
      %s128 = sshll.u32 [#allocation7], 4
      %s129 = int_to_ptr.vmem [resolvable:$true] %s128
      %134 = dma.vmem_to_hbm [thread:$0]  %s129, 768, %s2, [#allocation4], 128, 128, 8
    $region25: #{tpu_custom_call.1} parent=1 // pred_fallthru
      _
    // Predicated region
    $region26: #{tpu_custom_call.1} parent=1 // pred_check
      _
    $region27: #{tpu_custom_call.1} parent=1 // pred_check_branch
      %136 = sbr.rel (0) target = $region29
    $region28: #{tpu_custom_call.1} parent=1 // pred_region
      %137 = dma.done [#allocation4], 768
    $region29: #{tpu_custom_call.1} parent=1 // pred_fallthru
      _
    %138 = vsyncpa [#allocation3], 1
    %139 = vsyncpa [#allocation6], 1
    %140 = vsyncpa [#allocation4], 1

</llo_original>
